<compile_context>
chip_gen: v6e
topology: v6e:2x2x1
jax: 0.10.0
libtpu: 0.0.40
codegen_flags: <defaults>
</compile_context>

<pallas_src>
import functools

import jax
import jax.numpy as jnp
from jax import lax
from jax.experimental import pallas as pl
from jax.experimental.pallas import tpu as pltpu
import numpy as np


def _fold_bn(w, b, gamma, beta, mean, var, eps=1e-5):
    scale = gamma / jnp.sqrt(var + eps)
    return w * scale, (b - mean) * scale + beta


def init_params(key, c_in, c_out, squeeze):
    assert c_in == c_out, "SE is built with in_features; requires in==out (see module)"
    c_sq = c_in // squeeze
    ks = jax.random.split(key, 24)
    n = lambda k, shape, s=0.1: s * jax.random.normal(k, shape, jnp.float32)

    def bn(k0, k1, k2, k3, c):
        return dict(gamma=1.0 + n(k0, (c,)),
                    beta=n(k1, (c,)),
                    mean=n(k2, (c,)),
                    var=1.0 + 0.1 * jnp.abs(jax.random.normal(k3, (c,), jnp.float32)))

    return dict(
        # rb: conv3x3(stride 2, pad 1) -> BN -> ReLU -> conv3x3(pad 1) -> BN
        w1=n(ks[0], (3, 3, c_in, c_out)), b1=n(ks[1], (c_out,)),
        bn1=bn(ks[2], ks[3], ks[4], ks[5], c_out),
        w2=n(ks[6], (3, 3, c_out, c_out)), b2=n(ks[7], (c_out,)),
        bn2=bn(ks[8], ks[9], ks[10], ks[11], c_out),
        # ds: conv1x1(stride 2) -> BN
        wds=n(ks[12], (c_in, c_out)), bds=n(ks[13], (c_out,)),
        bnds=bn(ks[14], ks[15], ks[16], ks[17], c_out),
        # SE: global avgpool -> fc1 -> ReLU -> fc2 -> sigmoid -> scale
        wf1=n(ks[18], (c_in, c_sq)), bf1=n(ks[19], (c_sq,)),
        wf2=n(ks[20], (c_sq, c_in)), bf2=n(ks[21], (c_in,)),
    )


def fold_params(p):
    w1, b1 = _fold_bn(p['w1'], p['b1'], **p['bn1'])
    w2, b2 = _fold_bn(p['w2'], p['b2'], **p['bn2'])
    wds, bds = _fold_bn(p['wds'], p['bds'], **p['bnds'])
    return dict(w1=w1, b1=b1, w2=w2, b2=b2, wds=wds, bds=bds,
                wf1=p['wf1'], bf1=p['bf1'], wf2=p['wf2'], bf2=p['bf2'])


# ---------------------------------------------------------------------------
# One-time probe of pltpu.roll's shift convention so the static tap shifts are
# robust regardless of the installed JAX/Mosaic version's direction convention.
# ---------------------------------------------------------------------------
_ROLL_LIKE_JNP = None


def _roll_like_jnp():
    global _ROLL_LIKE_JNP
    if _ROLL_LIKE_JNP is None:
        def k(x_ref, o_ref):
            o_ref[...] = pltpu.roll(x_ref[...], 1, axis=1)
        x = jnp.broadcast_to(jnp.arange(128, dtype=jnp.float32), (8, 128))
        y = pl.pallas_call(k, out_shape=jax.ShapeDtypeStruct((8, 128), jnp.float32))(x)
        _ROLL_LIKE_JNP = bool(y[0, 0] == 127.0)   # jnp.roll(x, +1) puts x[-1] first
    return _ROLL_LIKE_JNP


def _make_kernel(N, C, Ho, Wo, roll_like_jnp):
    HW = Ho * Wo
    NHW = N * HW
    inv_hw = 1.0 / HW

    def lane_shift(z, row, col, di, dj):
        """out[:, n*HW + i*Wo + j] = z[:, n*HW + (i+di)*Wo + (j+dj)], 0 outside image."""
        d = di * Wo + dj
        if d == 0:
            return z
        amt = (-d) % NHW if roll_like_jnp else d % NHW
        zs = pltpu.roll(z, amt, axis=1)                 # XLU lane rotate (free slot)
        ok = ((row + di >= 0) & (row + di < Ho) &
              (col + dj >= 0) & (col + dj < Wo))
        return jnp.where(ok, zs, 0.0)

    def kernel(xph_ref, wc_ref, bc_ref, w2t_ref, b2_ref,
               wf1_ref, bf1_ref, wf2t_ref, bf2_ref, out_ref, col_ref):
        lane = lax.broadcasted_iota(jnp.int32, (C, NHW), 1)
        row = (lane % HW) // Wo
        col = lane % Wo

        # ---- conv1 (3x3, s2, p1) + downsample (1x1, s2), BN-folded: ONE matmul.
        # im2col of x assembled in VMEM from its 4 stride-2 phase slabs.
        for kh in range(3):
            for kw in range(3):
                dh, dw = kh - 1, kw - 1
                ph = xph_ref[abs(dh) * 2 + abs(dw)]                      # (C, NHW)
                tap = lane_shift(ph, row, col, min(dh, 0), min(dw, 0))
                col_ref[(kh * 3 + kw) * C:(kh * 3 + kw + 1) * C, :] = tap
        yc = jnp.dot(wc_ref[...], col_ref[...],
                     preferred_element_type=jnp.float32) + bc_ref[...]   # (2C, NHW)
        y1 = jnp.maximum(yc[:C, :], 0.0)        # conv1 + folded BN1 + ReLU
        idn = yc[C:, :]                         # identity path: conv1x1 s2 + BN

        # ---- conv2 (3x3, s1, p1): im2col of y1 via lane rolls, ONE matmul.
        for kh in range(3):
            for kw in range(3):
                col_ref[(kh * 3 + kw) * C:(kh * 3 + kw + 1) * C, :] = \
                    lane_shift(y1, row, col, kh - 1, kw - 1)
        y2 = jnp.dot(w2t_ref[...], col_ref[...],
                     preferred_element_type=jnp.float32) + b2_ref[...]   # (C, NHW)

        # ---- Squeeze-Excitation (per image) on VPU/XLU, residual add + ReLU.
        img = lane // HW
        gate = jnp.zeros((C, NHW), jnp.float32)
        for n in range(N):                      # N is small and static
            seg = img == n
            s_n = jnp.sum(jnp.where(seg, y2, 0.0), axis=1, keepdims=True) * inv_hw
            h_n = jnp.maximum(
                jnp.sum(wf1_ref[...] * s_n, axis=0, keepdims=True) + bf1_ref[...],
                0.0)                                                     # (1, Csq)
            g_n = jax.nn.sigmoid(
                jnp.sum(wf2t_ref[...] * h_n, axis=1, keepdims=True) + bf2_ref[...])
            gate = jnp.where(seg, g_n, gate)                             # (C, NHW)
        out_ref[...] = jnp.maximum(y2 * gate + idn, 0.0)

    return kernel


@functools.partial(jax.jit, static_argnames=("roll_like_jnp",))
def _se_block_impl(x_nchw, fp, roll_like_jnp):
    N, Cin, H, W = x_nchw.shape
    Cout = fp['w1'].shape[-1]
    Csq = fp['wf1'].shape[-1]
    assert Cin == Cout, "module is only shape-consistent when in_features == out_features"
    assert H % 2 == 0 and W % 2 == 0
    Ho, Wo = H // 2, W // 2
    NHW = N * Ho * Wo
    C = Cout

    # Glue: split x into its 4 stride-2 phases, channels -> sublanes, flattened
    # (n, i, j) output pixels -> lanes.  Exactly 1.0x HBM bytes of x, fused by jit.
    x = x_nchw.astype(jnp.float32)
    xt = jnp.transpose(x, (1, 0, 2, 3)).reshape(Cin, N, Ho, 2, Wo, 2)
    xph = jnp.transpose(xt, (3, 5, 0, 1, 2, 4)).reshape(4, Cin, NHW)

    # Weight prep (fused under jit).  conv1 and the 1x1-s2 downsample share one
    # (2*Cout, 9*Cin) left operand; the downsample weight sits in the
    # center-tap (kh=kw=1) columns.
    w1t = jnp.transpose(fp['w1'].reshape(9 * Cin, Cout))           # (Cout, 9*Cin)
    wds_exp = jnp.zeros((Cout, 9 * Cin), jnp.float32)
    wds_exp = wds_exp.at[:, 4 * Cin:5 * Cin].set(jnp.transpose(fp['wds']))
    wc = jnp.concatenate([w1t, wds_exp], axis=0)                   # (2*Cout, 9*Cin)
    bc = jnp.concatenate([fp['b1'], fp['bds']]).reshape(2 * Cout, 1)
    w2t = jnp.transpose(fp['w2'].reshape(9 * Cout, Cout))          # (Cout, 9*Cout)
    b2 = fp['b2'].reshape(Cout, 1)
    wf1 = fp['wf1']                                                # (Cout, Csq)
    bf1 = fp['bf1'].reshape(1, Csq)
    wf2t = jnp.transpose(fp['wf2'])                                # (Cout, Csq)
    bf2 = fp['bf2'].reshape(Cout, 1)

    kernel = _make_kernel(N, C, Ho, Wo, roll_like_jnp)

    def _full(shape):
        return pl.BlockSpec(shape, lambda i: (0,) * len(shape))

    out = pl.pallas_call(
        kernel,
        out_shape=jax.ShapeDtypeStruct((C, NHW), jnp.float32),
        grid=(1,),
        in_specs=[_full(xph.shape), _full(wc.shape), _full(bc.shape),
                  _full(w2t.shape), _full(b2.shape), _full(wf1.shape),
                  _full(bf1.shape), _full(wf2t.shape), _full(bf2.shape)],
        out_specs=_full((C, NHW)),
        scratch_shapes=[pltpu.VMEM((9 * C, NHW), jnp.float32)],
        compiler_params=pltpu.CompilerParams(dimension_semantics=("arbitrary",)),
    )(xph, wc, bc, w2t, b2, wf1, bf1, wf2t, bf2)

    # lane-dense (C, N*Ho*Wo) kernel result -> NCHW
    return jnp.transpose(out.reshape(C, N, Ho, Wo), (1, 0, 2, 3))


def se_block_forward(x_nchw, fp):
    return _se_block_impl(x_nchw, fp, roll_like_jnp=_roll_like_jnp())


def se_block_reference(x_nchw, fp):
    """Pure-JAX reference (same folded params) for correctness checking."""
    x = jnp.transpose(x_nchw, (0, 2, 3, 1)).astype(jnp.float32)
    dn = ('NHWC', 'HWIO', 'NHWC')
    y = lax.conv_general_dilated(x, fp['w1'], (2, 2), ((1, 1), (1, 1)),
                                 dimension_numbers=dn) + fp['b1']
    y = jnp.maximum(y, 0.0)
    y = lax.conv_general_dilated(y, fp['w2'], (1, 1), ((1, 1), (1, 1)),
                                 dimension_numbers=dn) + fp['b2']
    s = jnp.mean(y, axis=(1, 2), keepdims=True)
    h = jnp.maximum(jnp.einsum('nhwc,cd->nhwd', s, fp['wf1']) + fp['bf1'], 0.0)
    g = jax.nn.sigmoid(jnp.einsum('nhwc,cd->nhwd', h, fp['wf2']) + fp['bf2'])
    y = y * g
    idn = lax.conv_general_dilated(x, fp['wds'][None, None], (2, 2),
                                   ((0, 0), (0, 0)), dimension_numbers=dn) + fp['bds']
    out = jnp.maximum(y + idn, 0.0)
    return jnp.transpose(out, (0, 3, 1, 2))


if __name__ == "__main__":
    N, C, H, W = 2, 4, 16, 16          # in_features = out_features = 4
    squeeze = 2                        # downsample=True -> stride 2
    key = jax.random.PRNGKey(0)
    kx, kp = jax.random.split(key)
    x = jax.random.normal(kx, (N, C, H, W), jnp.float32)

    params = init_params(kp, C, C, squeeze)
    fp = fold_params(params)

    out = jax.block_until_ready(se_block_forward(x, fp))
    ref = se_block_reference(x, fp)
    assert out.shape == (N, C, H // 2, W // 2), out.shape
    np.testing.assert_allclose(np.asarray(out), np.asarray(ref), atol=2e-3, rtol=2e-3)
    print("KERNEL_OK")
</pallas_src>

<mosaic_0001>
module attributes {stable_mosaic.version = 11 : i64} {
  func.func @k(%arg0: memref<8x128xf32, #tpu.memory_space<vmem>>, %arg1: memref<8x128xf32, #tpu.memory_space<vmem>>) attributes {dimension_semantics = [], scalar_prefetch = 0 : i64, scratch_operands = 0 : i64, tpu.core_type = #tpu.core_type<tc>} {
    %c0 = arith.constant 0 : index
    %c0_0 = arith.constant 0 : index
    %0 = vector.load %arg0[%c0, %c0_0] : memref<8x128xf32, #tpu.memory_space<vmem>>, vector<8x128xf32>
    %c1_i32 = arith.constant 1 : i32
    %1 = tpu.dynamic_rotate %0 by %c1_i32 dim 1 : vector<8x128xf32>, i32 -> vector<8x128xf32>
    %c0_1 = arith.constant 0 : index
    %c0_2 = arith.constant 0 : index
    %2 = vector.load %arg1[%c0_1, %c0_2] : memref<8x128xf32, #tpu.memory_space<vmem>>, vector<8x128xf32>
    tpu.vector_store %arg1[%c0_1, %c0_2], %1 {strides = array<i32>} : memref<8x128xf32, #tpu.memory_space<vmem>>, vector<8x128xf32>,
    return
  }
}

</mosaic_0001>

<llo_original>
// kernel: tpu_custom_call.1
$region0: #{tpu_custom_call.1}
  #allocation0 [shape = 'u32[]', space=smem, size = 0x4, offset = 0x4, fixed_abs, tag = 'smem constant byte address 0x4 - core index']
  #allocation1 [shape = 'u32[144,128]{1,0:T(1,128)}', space=vmem, size = 0x12000, scoped, tag = 'internal scratch']
  %s0 = inlined_call_operand.hbm [shape: f32[8,128], index: 0, kind: input, shape index: {}]
  %s1 = inlined_call_operand.hbm [shape: f32[8,128], index: 1, kind: output, shape index: {}]
  %s2 = sld [smem:[#allocation0]]
  $region18: #{tpu_custom_call.1} parent=0
    _
  %s4 = ssub.s32 1, %s2
  %s5 = scalar_select 0, %s4, %s2
  $region1: #{tpu_custom_call.1} parent=0
    #allocation2 [shape = 'u8[4096]{0}', space=vmem, size = 0x1000, scoped, tag = 'input window, operand 0, single buffered']
    #allocation3 [shape = 's32[1]{0}', space=sflag, size = 0x4, scoped, tag = 'scoped memory for tpu_custom_call.1']
    #allocation4 [shape = 's32[1]{0}', space=sflag, size = 0x4, scoped, tag = 'scoped memory for tpu_custom_call.1']
    #allocation5 [shape = 'u8[4096]{0}', space=vmem, size = 0x1000, scoped, tag = 'output window, operand 0, single buffered']
    %6 = vsyncpa [#allocation3], 0
    %7 = vsyncpa [#allocation4], 0
    // Predicated region
    $region2: #{tpu_custom_call.1} parent=1 // pred_check
      _
    $region3: #{tpu_custom_call.1} parent=1 // pred_check_branch
      %9 = sbr.rel (0) target = $region5
    $region4: #{tpu_custom_call.1} parent=1 // pred_region
      %s11 = ssub.s32 128, 128
      %12 = vsyncadd [#allocation3], %s11
      %s14 = sshll.u32 [#allocation2], 4
      %s15 = int_to_ptr.vmem [resolvable:$true] %s14
      %17 = dma.hbm_to_vmem [thread:$0]  %s0, 128, %s15, [#allocation3]
    $region5: #{tpu_custom_call.1} parent=1 // pred_fallthru
      _
    // Predicated region
    $region6: #{tpu_custom_call.1} parent=1 // pred_check
      _
    $region7: #{tpu_custom_call.1} parent=1 // pred_check_branch
      %19 = sbr.rel (0) target = $region9
    $region8: #{tpu_custom_call.1} parent=1 // pred_region
      %20 = dma.done [#allocation3], 128
    $region9: #{tpu_custom_call.1} parent=1 // pred_fallthru
      _
    %v21 = vld [vmem:[#allocation2] sm:$0xff]
    %22 = vrot.lane.b32.xlu0 %v21, 1
    %v23 = vpop.permute.xlu0 %22
    %24 = vst [vmem:[#allocation5] sm:$0xff] %v23
    // Predicated region
    $region10: #{tpu_custom_call.1} parent=1 // pred_check
      _
    $region11: #{tpu_custom_call.1} parent=1 // pred_check_branch
      %26 = sbr.rel (0) target = $region13
    $region12: #{tpu_custom_call.1} parent=1 // pred_region
      %s28 = ssub.s32 128, 128
      %29 = vsyncadd [#allocation4], %s28
      %s31 = sshll.u32 [#allocation5], 4
      %s32 = int_to_ptr.vmem [resolvable:$true] %s31
      %34 = dma.vmem_to_hbm [thread:$0]  %s32, 128, %s1, [#allocation4]
    $region13: #{tpu_custom_call.1} parent=1 // pred_fallthru
      _
    // Predicated region
    $region14: #{tpu_custom_call.1} parent=1 // pred_check
      _
    $region15: #{tpu_custom_call.1} parent=1 // pred_check_branch
      %36 = sbr.rel (0) target = $region17
    $region16: #{tpu_custom_call.1} parent=1 // pred_region
      %37 = dma.done [#allocation4], 128
    $region17: #{tpu_custom_call.1} parent=1 // pred_fallthru
      _
    %38 = vsyncpa [#allocation3], 1
    %39 = vsyncpa [#allocation4], 1

</llo_original>
